<compile_context>
chip_gen: v5e
topology: v5e:2x2
jax: 0.10.0
libtpu: 0.0.40
codegen_flags: <defaults>
</compile_context>

<pallas_src>
import jax
import jax.numpy as jnp
from jax.experimental import pallas as pl
from jax.experimental.pallas import tpu as pltpu


# --------------------------------------------------------------------------
# Kernel body: all three "complex" submodules are identity, so out = x + x.
# --------------------------------------------------------------------------
def _respi_kernel(x_ref, o_ref):
    x = x_ref[...]
    o_ref[...] = x + x


# --------------------------------------------------------------------------
# Generation / dtype aware heuristics.
# --------------------------------------------------------------------------
def _sublane_multiple(dtype):
    """Sublane packing multiple: 8 for 32-bit, 16 for 16-bit, 32 for 8-bit."""
    itemsize = jnp.dtype(dtype).itemsize
    if itemsize >= 4:
        return 8
    if itemsize == 2:
        return 16
    return 32


def _tpu_generation():
    """Best-effort TPU generation detection (safe fallback if unknown)."""
    kind = ""
    try:
        kind = jax.devices()[0].device_kind.lower()
    except Exception:  # pragma: no cover - detection must never break the op
        pass
    if "v7" in kind:
        # v7x: 64 MiB VMEM per TC, 2 TCs/chip -> cap limit at 48 MiB,
        # ~10 MiB tiles (4 double-buffered copies = 40 MiB < 48 MiB).
        return dict(num_cores=2, tile_target=10 * 1024 * 1024,
                    vmem_limit=48 * 1024 * 1024)
    if "v6" in kind:
        # v6e: 128 MiB physical VMEM, 1 TC -> raise scoped limit, big tiles.
        return dict(num_cores=1, tile_target=10 * 1024 * 1024,
                    vmem_limit=100 * 1024 * 1024)
    if "v5 lite" in kind or "v5lite" in kind or "v5e" in kind:
        # v5e: 128 MiB physical, 16 MiB default scoped -> raise the limit
        # so ~8 MiB tiles fit with headroom for compiler scratch.
        return dict(num_cores=1, tile_target=8 * 1024 * 1024,
                    vmem_limit=96 * 1024 * 1024)
    # Unknown chip: stay under a 16 MiB default scoped limit (4 x 3 MiB).
    return dict(num_cores=1, tile_target=3 * 1024 * 1024, vmem_limit=None)


def _choose_lane_width(n):
    """Largest 128-multiple (<= 2048) that divides n, or None."""
    for lw in (2048, 1024, 512, 256, 128):
        if n % lw == 0:
            return lw
    return None


def _choose_row_tile(rows, row_bytes, sub, num_cores, target_bytes):
    """Row-tile size: largest tile <= target, dtype-aware sublane multiple,
    and (on multi-TC chips) a grid-step count that is a multiple of the
    core count so megacore sharding stays balanced."""
    bm = max(sub, target_bytes // max(1, row_bytes))
    bm = min(bm, rows)
    if bm < rows:
        bm = max(sub, (bm // sub) * sub)

    if num_cores > 1 and rows >= num_cores * sub:
        steps = pl.cdiv(rows, bm)
        steps = max(steps, num_cores)
        steps = ((steps + num_cores - 1) // num_cores) * num_cores
        bm = pl.cdiv(rows, steps)
        if bm < rows:
            bm = max(sub, ((bm + sub - 1) // sub) * sub)
        bm = min(bm, rows)
    return bm


# --------------------------------------------------------------------------
# pallas_call wrappers.
# --------------------------------------------------------------------------
def _doubling_call(x2, tile_rows, info):
    """Lane-dense tiled call on a (rows, L) view, L a multiple of 128."""
    rows, lanes = x2.shape
    itemsize = jnp.dtype(x2.dtype).itemsize

    if info["num_cores"] > 1 and hasattr(pltpu, "CORE_PARALLEL"):
        # Actually shard the row axis across both TensorCores on v7x.
        row_sem = pltpu.CORE_PARALLEL
    else:
        row_sem = pltpu.PARALLEL

    cp_kwargs = dict(dimension_semantics=(row_sem,))
    if info["vmem_limit"] is not None:
        cp_kwargs["vmem_limit_bytes"] = info["vmem_limit"]

    return pl.pallas_call(
        _respi_kernel,
        out_shape=jax.ShapeDtypeStruct((rows, lanes), x2.dtype),
        grid_spec=pltpu.PrefetchScalarGridSpec(
            num_scalar_prefetch=0,
            grid=(pl.cdiv(rows, tile_rows),),
            in_specs=[pl.BlockSpec((tile_rows, lanes), lambda i: (i, 0))],
            out_specs=pl.BlockSpec((tile_rows, lanes), lambda i: (i, 0)),
        ),
        compiler_params=pltpu.CompilerParams(**cp_kwargs),
        cost_estimate=pl.CostEstimate(
            flops=rows * lanes,                          # one add per element
            transcendentals=0,
            bytes_accessed=2 * rows * lanes * itemsize,  # read x + write out
        ),
    )(x2)


def _doubling_small(x2):
    """Single-block call for tiny / non-128-aligned tails (full-array block)."""
    return pl.pallas_call(
        _respi_kernel,
        out_shape=jax.ShapeDtypeStruct(x2.shape, x2.dtype),
    )(x2)


def respi_forward(x, *, row_tile=None):
    """RespiModule.forward: returns x + x via Pallas TPU kernels.

    Accepts any shape/dtype. The elementwise op lets us flatten and re-view
    the data lane-densely regardless of the logical last dimension.
    """
    orig_shape = x.shape
    n = x.size
    if n == 0:
        return x + x  # degenerate empty input

    info = _tpu_generation()
    sub = _sublane_multiple(x.dtype)
    itemsize = jnp.dtype(x.dtype).itemsize
    flat = x.reshape(-1)

    lane_width = _choose_lane_width(n)
    if lane_width is not None:
        rows = n // lane_width
        tile_rows = row_tile if row_tile is not None else _choose_row_tile(
            rows, lane_width * itemsize, sub, info["num_cores"],
            info["tile_target"])
        tile_rows = min(int(tile_rows), rows)
        out = _doubling_call(flat.reshape(rows, lane_width), tile_rows, info)
        return out.reshape(orig_shape)

    # Total size not a multiple of 128: lane-dense kernel on the aligned
    # prefix, tiny single-block kernel on the (< 128-element) tail.
    n_main = (n // 128) * 128
    parts = []
    if n_main:
        lane_width = _choose_lane_width(n_main)
        rows = n_main // lane_width
        tile_rows = row_tile if row_tile is not None else _choose_row_tile(
            rows, lane_width * itemsize, sub, info["num_cores"],
            info["tile_target"])
        tile_rows = min(int(tile_rows), rows)
        parts.append(
            _doubling_call(flat[:n_main].reshape(rows, lane_width),
                           tile_rows, info).reshape(-1))
    parts.append(_doubling_small(flat[n_main:].reshape(1, -1)).reshape(-1))
    return jnp.concatenate(parts).reshape(orig_shape)


if __name__ == "__main__":
    key = jax.random.PRNGKey(0)
    k1, k2, k3 = jax.random.split(key, 3)

    # Main case: lane-friendly shape, auto-sized single/large tiles.
    x = jax.random.normal(k1, (2, 4, 16, 128), jnp.float32)
    out = jax.block_until_ready(respi_forward(x))
    assert out.shape == x.shape
    assert jnp.allclose(out, x + x), "mismatch vs reference (auto tile)"

    # Multi-grid-step path (explicit small row tile), bf16 dtype.
    y = jax.random.normal(k2, (2, 128, 512), jnp.float32).astype(jnp.bfloat16)
    out_y = jax.block_until_ready(respi_forward(y, row_tile=16))
    assert jnp.allclose(out_y.astype(jnp.float32),
                        (y + y).astype(jnp.float32)), "mismatch (tiled bf16)"

    # Non-128-aligned total size -> prefix + tail path.
    z = jax.random.normal(k3, (3, 5, 7), jnp.float32)
    out_z = jax.block_until_ready(respi_forward(z))
    assert jnp.allclose(out_z, z + z), "mismatch vs reference (ragged tail)"

    print("KERNEL_OK")
</pallas_src>

<mosaic_0001>
module attributes {stable_mosaic.version = 11 : i64} {
  func.func @_respi_kernel(%arg0: i32, %arg1: memref<8x2048xf32, #tpu.memory_space<vmem>>, %arg2: memref<8x2048xf32, #tpu.memory_space<vmem>>) attributes {dimension_semantics = [#tpu.dimension_semantics<parallel>], iteration_bounds = array<i64: 1>, scalar_prefetch = 0 : i64, scratch_operands = 0 : i64, tpu.core_type = #tpu.core_type<tc>, window_params = [{transform_indices = @transform_0, window_bounds = array<i64: 8, 2048>}, {transform_indices = @transform_1, window_bounds = array<i64: 8, 2048>}]} {
    %c0 = arith.constant 0 : index
    %c0_0 = arith.constant 0 : index
    %0 = vector.load %arg1[%c0, %c0_0] : memref<8x2048xf32, #tpu.memory_space<vmem>>, vector<8x2048xf32>
    %1 = arith.addf %0, %0 : vector<8x2048xf32>
    %c0_1 = arith.constant 0 : index
    %c0_2 = arith.constant 0 : index
    %2 = vector.load %arg2[%c0_1, %c0_2] : memref<8x2048xf32, #tpu.memory_space<vmem>>, vector<8x2048xf32>
    tpu.vector_store %arg2[%c0_1, %c0_2], %1 {strides = array<i32>} : memref<8x2048xf32, #tpu.memory_space<vmem>>, vector<8x2048xf32>,
    return
  }
  func.func @transform_0(%arg0: i32) -> (i32, i32) {
    %c0_i32 = arith.constant 0 : i32
    %c0_i32_0 = arith.constant 0 : i32
    return %arg0, %c0_i32 : i32, i32
  }
  func.func @transform_1(%arg0: i32) -> (i32, i32) {
    %c0_i32 = arith.constant 0 : i32
    %c0_i32_0 = arith.constant 0 : i32
    return %arg0, %c0_i32 : i32, i32
  }
}

</mosaic_0001>

<llo_original>
// kernel: tpu_custom_call.1
$region0: #{tpu_custom_call.1}
  #allocation0 [shape = 'u32[]', space=smem, size = 0x4, offset = 0x4, fixed_abs, tag = 'smem constant byte address 0x4 - core index']
  #allocation1 [shape = 'u32[72,128]{1,0:T(1,128)}', space=vmem, size = 0x9000, scoped, tag = 'internal scratch']
  %s0 = inlined_call_operand.hbm [shape: f32[8,2048], index: 0, kind: input, shape index: {}]
  %s1 = inlined_call_operand.hbm [shape: f32[8,2048], index: 1, kind: output, shape index: {}]
  %s2 = sld [smem:[#allocation0]]
  $region18: #{tpu_custom_call.1} parent=0
    _
  %s4 = ssub.s32 1, %s2
  %s5 = scalar_select 0, %s4, %s2
  $region1: #{tpu_custom_call.1} parent=0
    #allocation2 [shape = 'u8[65536]{0}', space=vmem, size = 0x10000, scoped, tag = 'input window, operand 0, single buffered']
    #allocation3 [shape = 's32[1]{0}', space=sflag, size = 0x4, scoped, tag = 'scoped memory for tpu_custom_call.1']
    #allocation4 [shape = 's32[1]{0}', space=sflag, size = 0x4, scoped, tag = 'scoped memory for tpu_custom_call.1']
    #allocation5 [shape = 'u8[65536]{0}', space=vmem, size = 0x10000, scoped, tag = 'output window, operand 0, single buffered']
    %6 = vsyncpa [#allocation3], 0
    %7 = vsyncpa [#allocation4], 0
    // Predicated region
    $region2: #{tpu_custom_call.1} parent=1 // pred_check
      _
    $region3: #{tpu_custom_call.1} parent=1 // pred_check_branch
      %9 = sbr.rel (0) target = $region5
    $region4: #{tpu_custom_call.1} parent=1 // pred_region
      %11 = vsyncadd [#allocation3], 0
      %s13 = sshll.u32 %s0, 4
      %s14 = int_to_ptr.hbm [resolvable:$true] %s13
      %s15 = sshll.u32 [#allocation2], 4
      %s16 = int_to_ptr.vmem [resolvable:$true] %s15
      %18 = dma.hbm_to_vmem [thread:$0]  %s14, 2048, %s16, [#allocation3]
    $region5: #{tpu_custom_call.1} parent=1 // pred_fallthru
      _
    // Predicated region
    $region6: #{tpu_custom_call.1} parent=1 // pred_check
      _
    $region7: #{tpu_custom_call.1} parent=1 // pred_check_branch
      %20 = sbr.rel (0) target = $region9
    $region8: #{tpu_custom_call.1} parent=1 // pred_region
      %22 = dma.done [#allocation3], 2048
    $region9: #{tpu_custom_call.1} parent=1 // pred_fallthru
      _
    %v23 = vld [vmem:[#allocation2] sm:$0xff]
    %v24 = vld [vmem:[#allocation2 + $0x8] sm:$0xff]
    %v25 = vld [vmem:[#allocation2 + $0x10] sm:$0xff]
    %v26 = vld [vmem:[#allocation2 + $0x18] sm:$0xff]
    %v27 = vld [vmem:[#allocation2 + $0x20] sm:$0xff]
    %v28 = vld [vmem:[#allocation2 + $0x28] sm:$0xff]
    %v29 = vld [vmem:[#allocation2 + $0x30] sm:$0xff]
    %v30 = vld [vmem:[#allocation2 + $0x38] sm:$0xff]
    %v31 = vld [vmem:[#allocation2 + $0x40] sm:$0xff]
    %v32 = vld [vmem:[#allocation2 + $0x48] sm:$0xff]
    %v33 = vld [vmem:[#allocation2 + $0x50] sm:$0xff]
    %v34 = vld [vmem:[#allocation2 + $0x58] sm:$0xff]
    %v35 = vld [vmem:[#allocation2 + $0x60] sm:$0xff]
    %v36 = vld [vmem:[#allocation2 + $0x68] sm:$0xff]
    %v37 = vld [vmem:[#allocation2 + $0x70] sm:$0xff]
    %v38 = vld [vmem:[#allocation2 + $0x78] sm:$0xff]
    %v39 = vadd.f32 %v23, %v23
    %v40 = vadd.f32 %v24, %v24
    %v41 = vadd.f32 %v25, %v25
    %v42 = vadd.f32 %v26, %v26
    %v43 = vadd.f32 %v27, %v27
    %v44 = vadd.f32 %v28, %v28
    %v45 = vadd.f32 %v29, %v29
    %v46 = vadd.f32 %v30, %v30
    %v47 = vadd.f32 %v31, %v31
    %v48 = vadd.f32 %v32, %v32
    %v49 = vadd.f32 %v33, %v33
    %v50 = vadd.f32 %v34, %v34
    %v51 = vadd.f32 %v35, %v35
    %v52 = vadd.f32 %v36, %v36
    %v53 = vadd.f32 %v37, %v37
    %v54 = vadd.f32 %v38, %v38
    %55 = vst [vmem:[#allocation5] sm:$0xff] %v39
    %56 = vst [vmem:[#allocation5 + $0x8] sm:$0xff] %v40
    %57 = vst [vmem:[#allocation5 + $0x10] sm:$0xff] %v41
    %58 = vst [vmem:[#allocation5 + $0x18] sm:$0xff] %v42
    %59 = vst [vmem:[#allocation5 + $0x20] sm:$0xff] %v43
    %60 = vst [vmem:[#allocation5 + $0x28] sm:$0xff] %v44
    %61 = vst [vmem:[#allocation5 + $0x30] sm:$0xff] %v45
    %62 = vst [vmem:[#allocation5 + $0x38] sm:$0xff] %v46
    %63 = vst [vmem:[#allocation5 + $0x40] sm:$0xff] %v47
    %64 = vst [vmem:[#allocation5 + $0x48] sm:$0xff] %v48
    %65 = vst [vmem:[#allocation5 + $0x50] sm:$0xff] %v49
    %66 = vst [vmem:[#allocation5 + $0x58] sm:$0xff] %v50
    %67 = vst [vmem:[#allocation5 + $0x60] sm:$0xff] %v51
    %68 = vst [vmem:[#allocation5 + $0x68] sm:$0xff] %v52
    %69 = vst [vmem:[#allocation5 + $0x70] sm:$0xff] %v53
    %70 = vst [vmem:[#allocation5 + $0x78] sm:$0xff] %v54
    // Predicated region
    $region10: #{tpu_custom_call.1} parent=1 // pred_check
      _
    $region11: #{tpu_custom_call.1} parent=1 // pred_check_branch
      %72 = sbr.rel (0) target = $region13
    $region12: #{tpu_custom_call.1} parent=1 // pred_region
      %74 = vsyncadd [#allocation4], 0
      %s76 = sshll.u32 [#allocation5], 4
      %s77 = int_to_ptr.vmem [resolvable:$true] %s76
      %s78 = sshll.u32 %s1, 4
      %s79 = int_to_ptr.hbm [resolvable:$true] %s78
      %81 = dma.vmem_to_hbm [thread:$0]  %s77, 2048, %s79, [#allocation4]
    $region13: #{tpu_custom_call.1} parent=1 // pred_fallthru
      _
    // Predicated region
    $region14: #{tpu_custom_call.1} parent=1 // pred_check
      _
    $region15: #{tpu_custom_call.1} parent=1 // pred_check_branch
      %83 = sbr.rel (0) target = $region17
    $region16: #{tpu_custom_call.1} parent=1 // pred_region
      %85 = dma.done [#allocation4], 2048
    $region17: #{tpu_custom_call.1} parent=1 // pred_fallthru
      _
    %86 = vsyncpa [#allocation3], 1
    %87 = vsyncpa [#allocation4], 1

</llo_original>
